<compile_context>
chip_gen: v7x
topology: tpu7x:2x2x1
jax: 0.10.0
libtpu: 0.0.40
codegen_flags: <defaults>
</compile_context>

<pallas_src>
import functools

import jax
import jax.numpy as jnp
from jax.experimental import pallas as pl
from jax.experimental.pallas import tpu as pltpu

LANE = 128


# ----------------------------- Pallas kernel --------------------------------
def _mlp_bottle_kernel(x_ref,
                       w1s_ref, b1s_ref,  # fused [linear1[0] | skip] : input_len -> 2*bn_pad
                       w2_ref, b2_ref,    # linear1[2]: bn_pad -> bn_pad
                       w3_ref, b3_ref,    # linear2[0]: bn_pad -> bn_pad
                       w4_ref, b4_ref,    # linear2[2]: bn_pad -> out_pad
                       o_ref,
                       *, bn_pad):
    bf16 = jnp.bfloat16
    # f32 load, bf16 cast in-kernel (near-free VPU op, hidden under the x DMA).
    x = x_ref[...].astype(bf16)                       # (block_b, input_len)

    # Fused x @ [w1 | ws]: one 256-wide MXU push covers main + skip branches.
    # bn_pad % 128 == 0  ->  the split below is a tile-aligned view, not a shuffle.
    h1s = jnp.dot(x, w1s_ref[...], preferred_element_type=jnp.float32) + b1s_ref[...]
    h1 = jnp.maximum(h1s[:, :bn_pad], 0.0)            # linear1[0] + ReLU
    s = h1s[:, bn_pad:]                               # skip branch (no ReLU)

    # linear1[2]
    h2 = jnp.dot(h1.astype(bf16), w2_ref[...],
                 preferred_element_type=jnp.float32) + b2_ref[...]

    # x = act(linear1(x) + skip(x))   -- epilogue stays f32
    a = jnp.maximum(h2 + s, 0.0)

    # linear2 = Linear -> ReLU -> Linear
    h3 = jnp.maximum(jnp.dot(a.astype(bf16), w3_ref[...],
                             preferred_element_type=jnp.float32) + b3_ref[...], 0.0)
    y = jnp.dot(h3.astype(bf16), w4_ref[...],
                preferred_element_type=jnp.float32) + b4_ref[...]

    o_ref[...] = y.astype(o_ref.dtype)                # lane-dense (out_pad % 128 == 0) store


# ------------------------------- wrapper -------------------------------------
def mlp_bottle_pallas(x, packed, *, output_len, block_b=None):
    """x: (..., input_len) float32.  packed: dict from pack_params (bf16 weights,
    f32 biases, lane-padded).  Returns (..., output_len) float32."""
    *lead, input_len = x.shape
    x2 = x.reshape(-1, input_len)                     # stays f32; cast is in-kernel
    B = x2.shape[0]

    bn_pad = packed["w2"].shape[0]                    # bottleneck rounded up to 128
    out_pad = packed["w4p"].shape[1]                  # output_len rounded up to 128

    if block_b is None:
        if B >= 4096:
            block_b = 2048                            # large tiles: amortize per-step overhead
        elif B >= 512:
            # >= 2 parallel grid steps so both TensorCores are busy on v7x
            # (harmless on single-TC v5e/v6e: one extra ~0.35 us step).
            block_b = ((pl.cdiv(B, 2) + 7) // 8) * 8
        else:
            block_b = B                               # single grid step at small B

    # Pad the batch to a multiple of the tile (zero rows are inert, sliced off below).
    B_pad = pl.cdiv(B, block_b) * block_b
    if B_pad != B:
        x2 = jnp.pad(x2, ((0, B_pad - B), (0, 0)))
    if block_b != B_pad:
        assert block_b % 8 == 0, "batch tile must be sublane-aligned"
    grid = (B_pad // block_b,)

    def full(shape):
        # Constant index_map: block is loaded once and stays resident across steps.
        return pl.BlockSpec(shape, lambda i: (0, 0))

    # Scoped-VMEM budget: x/out tiles double-buffered, f32 intermediates, weights x2.
    weight_bytes = sum(int(v.size) * v.dtype.itemsize for v in packed.values())
    vmem_need = (2 * block_b * input_len * 4          # x (double-buffered, f32)
                 + 2 * block_b * out_pad * 4          # out (double-buffered, f32)
                 + block_b * (2 * bn_pad) * 4         # h1s
                 + 3 * block_b * bn_pad * 4           # h1 / a / h3 temporaries
                 + 2 * weight_bytes)
    vmem_limit = int(min(max(2 * vmem_need, 32 << 20), 48 << 20))

    out = pl.pallas_call(
        functools.partial(_mlp_bottle_kernel, bn_pad=bn_pad),
        out_shape=jax.ShapeDtypeStruct((B_pad, out_pad), jnp.float32),
        grid_spec=pltpu.PrefetchScalarGridSpec(
            num_scalar_prefetch=0,
            grid=grid,
            in_specs=[
                pl.BlockSpec((block_b, input_len), lambda i: (i, 0)),          # x tile
                full((input_len, 2 * bn_pad)), full((1, 2 * bn_pad)),          # [w1|ws], [b1|bs]
                full((bn_pad, bn_pad)), full((1, bn_pad)),                     # w2, b2
                full((bn_pad, bn_pad)), full((1, bn_pad)),                     # w3, b3
                full((bn_pad, out_pad)), full((1, out_pad)),                   # w4(pad), b4(pad)
            ],
            out_specs=pl.BlockSpec((block_b, out_pad), lambda i: (i, 0)),
        ),
        compiler_params=pltpu.CompilerParams(
            dimension_semantics=("parallel",),
            vmem_limit_bytes=vmem_limit),
    )(x2,
      packed["w1s"], packed["b1s"],
      packed["w2"], packed["b2"],
      packed["w3"], packed["b3"],
      packed["w4p"], packed["b4p"])

    y = out[:B, :output_len]                          # strip batch + lane padding
    return y.reshape(*lead, output_len)


# --------------------------- parameter setup (glue) --------------------------
def _weight_norm_effective(v, g):
    """PyTorch weight_norm (dim=0) effective weight.
    v: (out, in), g: (out,)  ->  W[i,:] = g[i] * v[i,:] / ||v[i,:]||."""
    norm = jnp.sqrt(jnp.sum(v * v, axis=1, keepdims=True))
    return (g[:, None] / norm) * v


def init_mlp_bottle_params(key, input_len, output_len, bottleneck):
    """Deterministic synthetic init. Returns effective weights pre-transposed to
    (in, out) and biases as (1, out), all float32."""
    ks = jax.random.split(key, 10)

    def make_linear(kv, kb, in_f, out_f):
        bound = 1.0 / jnp.sqrt(in_f)
        v = jax.random.uniform(kv, (out_f, in_f), jnp.float32, -bound, bound)
        g = jnp.sqrt(jnp.sum(v * v, axis=1)) * (1.0 + 0.1 * jnp.arange(out_f))
        b = jax.random.uniform(kb, (out_f,), jnp.float32, -bound, bound)
        w_eff = _weight_norm_effective(v, g)          # (out, in)
        return w_eff.T, b[None, :]                    # (in, out), (1, out)

    w1, b1 = make_linear(ks[0], ks[1], input_len, bottleneck)   # linear1[0]
    w2, b2 = make_linear(ks[2], ks[3], bottleneck, bottleneck)  # linear1[2]
    ws, bs = make_linear(ks[4], ks[5], input_len, bottleneck)   # skip
    w3, b3 = make_linear(ks[6], ks[7], bottleneck, bottleneck)  # linear2[0]
    w4, b4 = make_linear(ks[8], ks[9], bottleneck, output_len)  # linear2[2]
    return dict(w1=w1, b1=b1, w2=w2, b2=b2, ws=ws, bs=bs,
                w3=w3, b3=b3, w4=w4, b4=b4)


def pack_params(p, *, lane=LANE):
    """Lane-pad the bottleneck and output to multiples of 128, fuse w1|ws,
    cast MXU operands to bf16, keep biases f32.  Zero pads are numerically inert."""
    bf16 = jnp.bfloat16
    input_len = p["w1"].shape[0]
    bn = p["w2"].shape[0]
    output_len = p["w4"].shape[1]
    bn_pad = pl.cdiv(bn, lane) * lane
    out_pad = pl.cdiv(output_len, lane) * lane

    def pad2(w, rows, cols):
        return jnp.zeros((rows, cols), jnp.float32).at[:w.shape[0], :w.shape[1]].set(w)

    w1s = jnp.concatenate([pad2(p["w1"], input_len, bn_pad),
                           pad2(p["ws"], input_len, bn_pad)], axis=1).astype(bf16)
    b1s = jnp.concatenate([pad2(p["b1"], 1, bn_pad),
                           pad2(p["bs"], 1, bn_pad)], axis=1)               # f32

    packed = dict(
        w1s=w1s, b1s=b1s,
        w2=pad2(p["w2"], bn_pad, bn_pad).astype(bf16), b2=pad2(p["b2"], 1, bn_pad),
        w3=pad2(p["w3"], bn_pad, bn_pad).astype(bf16), b3=pad2(p["b3"], 1, bn_pad),
        w4p=pad2(p["w4"], bn_pad, out_pad).astype(bf16), b4p=pad2(p["b4"], 1, out_pad),
    )
    return packed, output_len


# ----------------------------- pure-JAX reference ----------------------------
def mlp_bottle_ref(x, p, *, bf16_matmul=False):
    if bf16_matmul:
        def mm(a, w):
            return jnp.dot(a.astype(jnp.bfloat16), w.astype(jnp.bfloat16),
                           preferred_element_type=jnp.float32)
    else:
        def mm(a, w):
            return a @ w
    h1 = jnp.maximum(mm(x, p["w1"]) + p["b1"], 0.0)
    h2 = mm(h1, p["w2"]) + p["b2"]
    s = mm(x, p["ws"]) + p["bs"]
    a = jnp.maximum(h2 + s, 0.0)
    h3 = jnp.maximum(mm(a, p["w3"]) + p["b3"], 0.0)
    return mm(h3, p["w4"]) + p["b4"]


# ------------------------------------ main -----------------------------------
if __name__ == "__main__":
    input_len, output_len, bottleneck = 16, 24, 32

    key = jax.random.PRNGKey(0)
    kx, kp, kx2 = jax.random.split(key, 3)

    raw = init_mlp_bottle_params(kp, input_len, output_len, bottleneck)
    packed, out_len = pack_params(raw)

    fn = jax.jit(functools.partial(mlp_bottle_pallas, output_len=out_len))

    # Case 1: small leading dims (folded batch of 16) -> single grid step.
    lead = (2, 8)
    x = jax.random.normal(kx, (*lead, input_len), dtype=jnp.float32)
    out = jax.block_until_ready(fn(x, packed))
    assert out.shape == (*lead, output_len)

    x_flat = x.reshape(-1, input_len)
    ref_bf = mlp_bottle_ref(x_flat, raw, bf16_matmul=True).reshape(*lead, out_len)
    assert jnp.allclose(out, ref_bf, atol=1e-3, rtol=1e-3), "mismatch vs bf16 reference"
    ref_f32 = mlp_bottle_ref(x_flat, raw, bf16_matmul=False).reshape(*lead, out_len)
    assert jnp.allclose(out, ref_f32, atol=1e-1, rtol=1e-1), "mismatch vs f32 reference"

    # Case 2: ragged batch (600 rows) -> exercises batch zero-padding and a
    # 2-step "parallel" grid (both TensorCores on v7x).
    x_big = jax.random.normal(kx2, (600, input_len), dtype=jnp.float32)
    out_big = jax.block_until_ready(fn(x_big, packed))
    assert out_big.shape == (600, output_len)
    ref_big = mlp_bottle_ref(x_big, raw, bf16_matmul=True)
    assert jnp.allclose(out_big, ref_big, atol=1e-3, rtol=1e-3), "mismatch (ragged batch)"

    print("KERNEL_OK")
</pallas_src>

<mosaic_0001>
module attributes {stable_mosaic.version = 11 : i64} {
  func.func @_mlp_bottle_kernel(%arg0: i32, %arg1: memref<16x16xf32, #tpu.memory_space<vmem>>, %arg2: memref<16x256xbf16, #tpu.memory_space<vmem>>, %arg3: memref<1x256xf32, #tpu.memory_space<vmem>>, %arg4: memref<128x128xbf16, #tpu.memory_space<vmem>>, %arg5: memref<1x128xf32, #tpu.memory_space<vmem>>, %arg6: memref<128x128xbf16, #tpu.memory_space<vmem>>, %arg7: memref<1x128xf32, #tpu.memory_space<vmem>>, %arg8: memref<128x128xbf16, #tpu.memory_space<vmem>>, %arg9: memref<1x128xf32, #tpu.memory_space<vmem>>, %arg10: memref<16x128xf32, #tpu.memory_space<vmem>>) attributes {dimension_semantics = [#tpu.dimension_semantics<parallel>], iteration_bounds = array<i64: 1>, scalar_prefetch = 0 : i64, scratch_operands = 0 : i64, tpu.core_type = #tpu.core_type<tc>, window_params = [{transform_indices = @transform_0, window_bounds = array<i64: 16, 16>}, {pipeline_mode = #tpu.pipeline_mode<synchronous>, transform_indices = @transform_1, window_bounds = array<i64: 16, 256>}, {pipeline_mode = #tpu.pipeline_mode<synchronous>, transform_indices = @transform_2, window_bounds = array<i64: 1, 256>}, {pipeline_mode = #tpu.pipeline_mode<synchronous>, transform_indices = @transform_3, window_bounds = array<i64: 128, 128>}, {pipeline_mode = #tpu.pipeline_mode<synchronous>, transform_indices = @transform_4, window_bounds = array<i64: 1, 128>}, {pipeline_mode = #tpu.pipeline_mode<synchronous>, transform_indices = @transform_5, window_bounds = array<i64: 128, 128>}, {pipeline_mode = #tpu.pipeline_mode<synchronous>, transform_indices = @transform_6, window_bounds = array<i64: 1, 128>}, {pipeline_mode = #tpu.pipeline_mode<synchronous>, transform_indices = @transform_7, window_bounds = array<i64: 128, 128>}, {pipeline_mode = #tpu.pipeline_mode<synchronous>, transform_indices = @transform_8, window_bounds = array<i64: 1, 128>}, {transform_indices = @transform_9, window_bounds = array<i64: 16, 128>}]} {
    %c0 = arith.constant 0 : index
    %c0_0 = arith.constant 0 : index
    %0 = vector.load %arg1[%c0, %c0_0] : memref<16x16xf32, #tpu.memory_space<vmem>>, vector<16x16xf32>
    %1 = arith.truncf %0 : vector<16x16xf32> to vector<16x16xbf16>
    %c0_1 = arith.constant 0 : index
    %c0_2 = arith.constant 0 : index
    %2 = vector.load %arg2[%c0_1, %c0_2] : memref<16x256xbf16, #tpu.memory_space<vmem>>, vector<16x256xbf16>
    %cst = arith.constant dense<0.000000e+00> : vector<16x256xf32>
    %3 = tpu.matmul %1, %2, %cst {dimension_numbers = #tpu.dot_dimension_numbers<[1], [0], [0], [1], [0, 0, 1, 1], [], []>} : vector<16x16xbf16>, vector<16x256xbf16>, vector<16x256xf32> -> vector<16x256xf32>
    %c0_3 = arith.constant 0 : index
    %c0_4 = arith.constant 0 : index
    %4 = vector.load %arg3[%c0_3, %c0_4] : memref<1x256xf32, #tpu.memory_space<vmem>>, vector<1x256xf32>
    %5 = vector.broadcast %4 : vector<1x256xf32> to vector<16x256xf32>
    %6 = arith.addf %3, %5 : vector<16x256xf32>
    %7 = vector.extract_strided_slice %6 {offsets = [0, 0], sizes = [16, 128], strides = [1, 1]} : vector<16x256xf32> to vector<16x128xf32>
    %cst_5 = arith.constant 0.000000e+00 : f32
    %8 = vector.broadcast %cst_5 : f32 to vector<16x128xf32>
    %9 = arith.maximumf %7, %8 : vector<16x128xf32>
    %10 = vector.extract_strided_slice %6 {offsets = [0, 128], sizes = [16, 128], strides = [1, 1]} : vector<16x256xf32> to vector<16x128xf32>
    %11 = arith.truncf %9 : vector<16x128xf32> to vector<16x128xbf16>
    %c0_6 = arith.constant 0 : index
    %c0_7 = arith.constant 0 : index
    %12 = vector.load %arg4[%c0_6, %c0_7] : memref<128x128xbf16, #tpu.memory_space<vmem>>, vector<128x128xbf16>
    %cst_8 = arith.constant dense<0.000000e+00> : vector<16x128xf32>
    %13 = tpu.matmul %11, %12, %cst_8 {dimension_numbers = #tpu.dot_dimension_numbers<[1], [0], [0], [1], [0, 0, 1, 1], [], []>} : vector<16x128xbf16>, vector<128x128xbf16>, vector<16x128xf32> -> vector<16x128xf32>
    %c0_9 = arith.constant 0 : index
    %c0_10 = arith.constant 0 : index
    %14 = vector.load %arg5[%c0_9, %c0_10] : memref<1x128xf32, #tpu.memory_space<vmem>>, vector<1x128xf32>
    %15 = vector.broadcast %14 : vector<1x128xf32> to vector<16x128xf32>
    %16 = arith.addf %13, %15 : vector<16x128xf32>
    %17 = arith.addf %16, %10 : vector<16x128xf32>
    %cst_11 = arith.constant 0.000000e+00 : f32
    %18 = vector.broadcast %cst_11 : f32 to vector<16x128xf32>
    %19 = arith.maximumf %17, %18 : vector<16x128xf32>
    %20 = arith.truncf %19 : vector<16x128xf32> to vector<16x128xbf16>
    %c0_12 = arith.constant 0 : index
    %c0_13 = arith.constant 0 : index
    %21 = vector.load %arg6[%c0_12, %c0_13] : memref<128x128xbf16, #tpu.memory_space<vmem>>, vector<128x128xbf16>
    %cst_14 = arith.constant dense<0.000000e+00> : vector<16x128xf32>
    %22 = tpu.matmul %20, %21, %cst_14 {dimension_numbers = #tpu.dot_dimension_numbers<[1], [0], [0], [1], [0, 0, 1, 1], [], []>} : vector<16x128xbf16>, vector<128x128xbf16>, vector<16x128xf32> -> vector<16x128xf32>
    %c0_15 = arith.constant 0 : index
    %c0_16 = arith.constant 0 : index
    %23 = vector.load %arg7[%c0_15, %c0_16] : memref<1x128xf32, #tpu.memory_space<vmem>>, vector<1x128xf32>
    %24 = vector.broadcast %23 : vector<1x128xf32> to vector<16x128xf32>
    %25 = arith.addf %22, %24 : vector<16x128xf32>
    %cst_17 = arith.constant 0.000000e+00 : f32
    %26 = vector.broadcast %cst_17 : f32 to vector<16x128xf32>
    %27 = arith.maximumf %25, %26 : vector<16x128xf32>
    %28 = arith.truncf %27 : vector<16x128xf32> to vector<16x128xbf16>
    %c0_18 = arith.constant 0 : index
    %c0_19 = arith.constant 0 : index
    %29 = vector.load %arg8[%c0_18, %c0_19] : memref<128x128xbf16, #tpu.memory_space<vmem>>, vector<128x128xbf16>
    %cst_20 = arith.constant dense<0.000000e+00> : vector<16x128xf32>
    %30 = tpu.matmul %28, %29, %cst_20 {dimension_numbers = #tpu.dot_dimension_numbers<[1], [0], [0], [1], [0, 0, 1, 1], [], []>} : vector<16x128xbf16>, vector<128x128xbf16>, vector<16x128xf32> -> vector<16x128xf32>
    %c0_21 = arith.constant 0 : index
    %c0_22 = arith.constant 0 : index
    %31 = vector.load %arg9[%c0_21, %c0_22] : memref<1x128xf32, #tpu.memory_space<vmem>>, vector<1x128xf32>
    %32 = vector.broadcast %31 : vector<1x128xf32> to vector<16x128xf32>
    %33 = arith.addf %30, %32 : vector<16x128xf32>
    %c0_23 = arith.constant 0 : index
    %c0_24 = arith.constant 0 : index
    %34 = vector.load %arg10[%c0_23, %c0_24] : memref<16x128xf32, #tpu.memory_space<vmem>>, vector<16x128xf32>
    tpu.vector_store %arg10[%c0_23, %c0_24], %33 {strides = array<i32>} : memref<16x128xf32, #tpu.memory_space<vmem>>, vector<16x128xf32>,
    return
  }
  func.func @transform_0(%arg0: i32) -> (i32, i32) {
    %c0_i32 = arith.constant 0 : i32
    %c0_i32_0 = arith.constant 0 : i32
    return %arg0, %c0_i32 : i32, i32
  }
  func.func @transform_1(%arg0: i32) -> (i32, i32) {
    %c0_i32 = arith.constant 0 : i32
    %c0_i32_0 = arith.constant 0 : i32
    %c0_i32_1 = arith.constant 0 : i32
    return %c0_i32, %c0_i32_0 : i32, i32
  }
  func.func @transform_2(%arg0: i32) -> (i32, i32) {
    %c0_i32 = arith.constant 0 : i32
    %c0_i32_0 = arith.constant 0 : i32
    %c0_i32_1 = arith.constant 0 : i32
    return %c0_i32, %c0_i32_0 : i32, i32
  }
  func.func @transform_3(%arg0: i32) -> (i32, i32) {
    %c0_i32 = arith.constant 0 : i32
    %c0_i32_0 = arith.constant 0 : i32
    %c0_i32_1 = arith.constant 0 : i32
    return %c0_i32, %c0_i32_0 : i32, i32
  }
  func.func @transform_4(%arg0: i32) -> (i32, i32) {
    %c0_i32 = arith.constant 0 : i32
    %c0_i32_0 = arith.constant 0 : i32
    %c0_i32_1 = arith.constant 0 : i32
    return %c0_i32, %c0_i32_0 : i32, i32
  }
  func.func @transform_5(%arg0: i32) -> (i32, i32) {
    %c0_i32 = arith.constant 0 : i32
    %c0_i32_0 = arith.constant 0 : i32
    %c0_i32_1 = arith.constant 0 : i32
    return %c0_i32, %c0_i32_0 : i32, i32
  }
  func.func @transform_6(%arg0: i32) -> (i32, i32) {
    %c0_i32 = arith.constant 0 : i32
    %c0_i32_0 = arith.constant 0 : i32
    %c0_i32_1 = arith.constant 0 : i32
    return %c0_i32, %c0_i32_0 : i32, i32
  }
  func.func @transform_7(%arg0: i32) -> (i32, i32) {
    %c0_i32 = arith.constant 0 : i32
    %c0_i32_0 = arith.constant 0 : i32
    %c0_i32_1 = arith.constant 0 : i32
    return %c0_i32, %c0_i32_0 : i32, i32
  }
  func.func @transform_8(%arg0: i32) -> (i32, i32) {
    %c0_i32 = arith.constant 0 : i32
    %c0_i32_0 = arith.constant 0 : i32
    %c0_i32_1 = arith.constant 0 : i32
    return %c0_i32, %c0_i32_0 : i32, i32
  }
  func.func @transform_9(%arg0: i32) -> (i32, i32) {
    %c0_i32 = arith.constant 0 : i32
    %c0_i32_0 = arith.constant 0 : i32
    return %arg0, %c0_i32 : i32, i32
  }
}

</mosaic_0001>

<llo_original>
// kernel: mlp_bottle_pallas.1
$region0: #{mlp_bottle_pallas.1}
  #allocation0 [shape = 'u32[]', space=smem, size = 0x4, offset = 0x4, fixed_abs, tag = 'smem constant byte address 0x4 - core index']
  #allocation1 [shape = 'u32[144,128]{1,0:T(1,128)}', space=vmem, size = 0x12000, scoped, tag = 'internal scratch']
  %s0 = inlined_call_operand.hbm [shape: f32[16,16], index: 0, kind: input, shape index: {}]
  %s1 = inlined_call_operand.vmem [shape: bf16[16,256], index: 1, kind: input, shape index: {}]
  %s2 = inlined_call_operand.vmem [shape: f32[1,256], index: 2, kind: input, shape index: {}]
  %s3 = inlined_call_operand.hbm [shape: bf16[128,128], index: 3, kind: input, shape index: {}]
  %s4 = inlined_call_operand.vmem [shape: f32[1,128], index: 4, kind: input, shape index: {}]
  %s5 = inlined_call_operand.hbm [shape: bf16[128,128], index: 5, kind: input, shape index: {}]
  %s6 = inlined_call_operand.vmem [shape: f32[1,128], index: 6, kind: input, shape index: {}]
  %s7 = inlined_call_operand.hbm [shape: bf16[128,128], index: 7, kind: input, shape index: {}]
  %s8 = inlined_call_operand.vmem [shape: f32[1,128], index: 8, kind: input, shape index: {}]
  %s9 = inlined_call_operand.vmem [shape: f32[16,128], index: 9, kind: output, shape index: {}]
  %s10 = sld [smem:[#allocation0]]
  $region62: #{mlp_bottle_pallas.1} parent=0
    _
  %s12 = ssub.s32 1, %s10
  %s13 = scalar_select 0, %s12, %s10
  $region1: #{mlp_bottle_pallas.1} parent=0
    #allocation2 [shape = 'u8[8192]{0}', space=vmem, size = 0x2000, scoped, tag = 'input window, operand 0, single buffered']
    #allocation3 [shape = 's32[1]{0}', space=sflag, size = 0x4, scoped, tag = 'scoped memory for mlp_bottle_pallas.1']
    #allocation4 [shape = 'u8[32768]{0}', space=vmem, size = 0x8000, scoped, tag = 'input window, operand 3, single buffered']
    #allocation5 [shape = 's32[1]{0}', space=sflag, size = 0x4, scoped, tag = 'scoped memory for mlp_bottle_pallas.1']
    #allocation6 [shape = 'u8[32768]{0}', space=vmem, size = 0x8000, scoped, tag = 'input window, operand 5, single buffered']
    #allocation7 [shape = 'u8[32768]{0}', space=vmem, size = 0x8000, scoped, tag = 'input window, operand 7, single buffered']
    #allocation8 [shape = 's32[1]{0}', space=sflag, size = 0x4, scoped, tag = 'scoped memory for mlp_bottle_pallas.1']
    %14 = vsyncpa [#allocation3], 0
    %15 = vsyncpa [#allocation5], 0
    %16 = vsyncpa [#allocation8], 0
    // Predicated region
    $region2: #{mlp_bottle_pallas.1} parent=1 // pred_check
      _
    $region3: #{mlp_bottle_pallas.1} parent=1 // pred_check_branch
      %18 = sbr.rel (0) target = $region5
    $region4: #{mlp_bottle_pallas.1} parent=1 // pred_region
      %s20 = ssub.s32 256, 256
      %21 = vsyncadd [#allocation3], %s20
      %s22 = sshll.u32 [#allocation2], 4
      %s23 = int_to_ptr.vmem [resolvable:$true] %s22
      %28 = dma.hbm_to_vmem [thread:$0]  %s0, 256, %s23, [#allocation3], 128, 128, 8
    $region5: #{mlp_bottle_pallas.1} parent=1 // pred_fallthru
      _
    // Predicated region
    $region6: #{mlp_bottle_pallas.1} parent=1 // pred_check
      _
    $region7: #{mlp_bottle_pallas.1} parent=1 // pred_check_branch
      %30 = sbr.rel (0) target = $region9
    $region8: #{mlp_bottle_pallas.1} parent=1 // pred_region
      _
    $region9: #{mlp_bottle_pallas.1} parent=1 // pred_fallthru
      _
    // Predicated region
    $region10: #{mlp_bottle_pallas.1} parent=1 // pred_check
      _
    $region11: #{mlp_bottle_pallas.1} parent=1 // pred_check_branch
      %32 = sbr.rel (0) target = $region13
    $region12: #{mlp_bottle_pallas.1} parent=1 // pred_region
      _
    $region13: #{mlp_bottle_pallas.1} parent=1 // pred_fallthru
      _
    // Predicated region
    $region14: #{mlp_bottle_pallas.1} parent=1 // pred_check
      _
    $region15: #{mlp_bottle_pallas.1} parent=1 // pred_check_branch
      %34 = sbr.rel (0) target = $region17
    $region16: #{mlp_bottle_pallas.1} parent=1 // pred_region
      %s36 = ssub.s32 1024, 1024
      %37 = vsyncadd [#allocation5], %s36
      %s38 = sshll.u32 [#allocation4], 4
      %s39 = int_to_ptr.vmem [resolvable:$true] %s38
      %44 = dma.hbm_to_vmem [thread:$0]  %s3, 1024, %s39, [#allocation5], 64, 64, 4
    $region17: #{mlp_bottle_pallas.1} parent=1 // pred_fallthru
      _
    // Predicated region
    $region18: #{mlp_bottle_pallas.1} parent=1 // pred_check
      _
    $region19: #{mlp_bottle_pallas.1} parent=1 // pred_check_branch
      %46 = sbr.rel (0) target = $region21
    $region20: #{mlp_bottle_pallas.1} parent=1 // pred_region
      _
    $region21: #{mlp_bottle_pallas.1} parent=1 // pred_fallthru
      _
    // Predicated region
    $region22: #{mlp_bottle_pallas.1} parent=1 // pred_check
      _
    $region23: #{mlp_bottle_pallas.1} parent=1 // pred_check_branch
      %48 = sbr.rel (0) target = $region25
    $region24: #{mlp_bottle_pallas.1} parent=1 // pred_region
      %s50 = ssub.s32 1024, 1024
      %51 = vsyncadd [#allocation5], %s50
      %s52 = sshll.u32 [#allocation6], 4
      %s53 = int_to_ptr.vmem [resolvable:$true] %s52
      %58 = dma.hbm_to_vmem [thread:$0]  %s5, 1024, %s53, [#allocation5], 64, 64, 4
    $region25: #{mlp_bottle_pallas.1} parent=1 // pred_fallthru
      _
    // Predicated region
    $region26: #{mlp_bottle_pallas.1} parent=1 // pred_check
      _
    $region27: #{mlp_bottle_pallas.1} parent=1 // pred_check_branch
      %60 = sbr.rel (0) target = $region29
    $region28: #{mlp_bottle_pallas.1} parent=1 // pred_region
      _
    $region29: #{mlp_bottle_pallas.1} parent=1 // pred_fallthru
      _
    // Predicated region
    $region30: #{mlp_bottle_pallas.1} parent=1 // pred_check
      _
    $region31: #{mlp_bottle_pallas.1} parent=1 // pred_check_branch
      %62 = sbr.rel (0) target = $region33
    $region32: #{mlp_bottle_pallas.1} parent=1 // pred_region
      %s64 = ssub.s32 1024, 1024
      %65 = vsyncadd [#allocation8], %s64
      %s66 = sshll.u32 [#allocation7], 4
      %s67 = int_to_ptr.vmem [resolvable:$true] %s66
      %72 = dma.hbm_to_vmem [thread:$0]  %s7, 1024, %s67, [#allocation8], 64, 64, 4
    $region33: #{mlp_bottle_pallas.1} parent=1 // pred_fallthru
      _
    // Predicated region
    $region34: #{mlp_bottle_pallas.1} parent=1 // pred_check
      _
    $region35: #{mlp_bottle_pallas.1} parent=1 // pred_check_branch
      %74 = sbr.rel (0) target = $region37
    $region36: #{mlp_bottle_pallas.1} parent=1 // pred_region
      _
    $region37: #{mlp_bottle_pallas.1} parent=1 // pred_fallthru
      _
    // Predicated region
    $region38: #{mlp_bottle_pallas.1} parent=1 // pred_check
      _
    $region39: #{mlp_bottle_pallas.1} parent=1 // pred_check_branch
      %76 = sbr.rel (0) target = $region41
    $region40: #{mlp_bottle_pallas.1} parent=1 // pred_region
      %77 = dma.done [#allocation3], 256
    $region41: #{mlp_bottle_pallas.1} parent=1 // pred_fallthru
      _
    // Predicated region
    $region42: #{mlp_bottle_pallas.1} parent=1 // pred_check
      _
    $region43: #{mlp_bottle_pallas.1} parent=1 // pred_check_branch
      %79 = sbr.rel (0) target = $region45
    $region44: #{mlp_bottle_pallas.1} parent=1 // pred_region
      %80 = dma.done [#allocation5], 1024
    $region45: #{mlp_bottle_pallas.1} parent=1 // pred_fallthru
      _
    // Predicated region
    $region46: #{mlp_bottle_pallas.1} parent=1 // pred_check
      _
    $region47: #{mlp_bottle_pallas.1} parent=1 // pred_check_branch
      %82 = sbr.rel (0) target = $region49
    $region48: #{mlp_bottle_pallas.1} parent=1 // pred_region
      %83 = dma.done [#allocation5], 1024
    $region49: #{mlp_bottle_pallas.1} parent=1 // pred_fallthru
      _
    // Predicated region
    $region50: #{mlp_bottle_pallas.1} parent=1 // pred_check
      _
    $region51: #{mlp_bottle_pallas.1} parent=1 // pred_check_branch
      %85 = sbr.rel (0) target = $region53
    $region52: #{mlp_bottle_pallas.1} parent=1 // pred_region
      %86 = dma.done [#allocation8], 1024
    $region53: #{mlp_bottle_pallas.1} parent=1 // pred_fallthru
      _
    %v88 = vld [vmem:[#allocation2] sm:$0xff]
    %v89 = vld [vmem:[#allocation2 + $0x8] sm:$0xff]
    %v90 = vpack.c.bf16 %v89, %v88
    %v91 = vld [vmem:[%s1] sm:$0xff]
    %v92 = vld [vmem:[%s1 + $0x8] sm:$0xff]
    %v93 = vld [vmem:[%s2] sm:$0x3]
    %v95 = vlaneseq
    %v96 = vshrl.u32 %v95, 7
    %v97 = vsub.s32 0, %v96
    %v98 = vrot.slane %v93, %v97
    %v99 = vlaneseq
    %v100 = vshrl.u32 %v99, 7
    %v101 = vsub.s32 1, %v100
    %v102 = vrot.slane %v93, %v101
    %v107 = vunpack.c.l.b16 %v91
    %v108 = vunpack.c.h.b16 %v91
    %v109 = vunpack.c.l.b16 %v92
    %v110 = vunpack.c.h.b16 %v92
    %v111 = vpack.c.b16 %v109, %v107
    %v112 = vpack.c.b16 %v110, %v108
    %vm115 = vcmask 130048
    %v117 = vsel %vm115, %v90, 0
    %119 = vmatprep.subr.bf16.mxu0 %v112
    %120 = vmatpush1.bf16.msra.mxu0 %v111
    %121 = vmatprep.subr.bf16.mxu0 0
    %122 = vmatpush1.bf16.msra.mxu0 0
    %123 = vmatprep.subr.bf16.mxu0 0
    %124 = vmatpush1.bf16.msra.mxu0 0
    %125 = vmatprep.subr.bf16.mxu0 0
    %126 = vmatpush1.bf16.msra.mxu0 0
    %127 = vmatprep.subr.bf16.mxu0 0
    %128 = vmatpush1.bf16.msra.mxu0 0
    %129 = vmatprep.subr.bf16.mxu0 0
    %130 = vmatpush1.bf16.msra.mxu0 0
    %131 = vmatprep.subr.bf16.mxu0 0
    %132 = vmatpush1.bf16.msra.mxu0 0
    %133 = vmatprep.subr.bf16.mxu0 0
    %134 = vmatpush1.bf16.msra.mxu0 0
    %135 = vmatprep.subr.bf16.mxu0 0
    %136 = vmatpush1.bf16.msra.mxu0 0
    %137 = vmatprep.subr.bf16.mxu0 0
    %138 = vmatpush1.bf16.msra.mxu0 0
    %139 = vmatprep.subr.bf16.mxu0 0
    %140 = vmatpush1.bf16.msra.mxu0 0
    %141 = vmatprep.subr.bf16.mxu0 0
    %142 = vmatpush1.bf16.msra.mxu0 0
    %143 = vmatprep.subr.bf16.mxu0 0
    %144 = vmatpush1.bf16.msra.mxu0 0
    %145 = vmatprep.subr.bf16.mxu0 0
    %146 = vmatpush1.bf16.msra.mxu0 0
    %147 = vmatprep.subr.bf16.mxu0 0
    %148 = vmatpush1.bf16.msra.mxu0 0
    %149 = vmatprep.subr.bf16.mxu0 0
    %150 = vmatpush1.bf16.msra.mxu0 0
    %151 = vmatprep.mubr.bf16.mxu0 0
    %152 = vmatmul.mubr.bf16.gmra.mrb[0].mxu0 %v117
    %v153 = vpop.f32.mrb[0].mxu0
    %v154 = vadd.f32 %v98, %v153
    %v155 = vpop.f32.mrb[0].mxu0
    %v156 = vadd.f32 %v102, %v155
    %v157 = vpop.f32.mrb[0].mxu0
    %v158 = vadd.f32 %v98, %v157
    %v159 = vpop.f32.mrb[0].mxu0
    %v160 = vadd.f32 %v102, %v159
    %161 = vdwg.mxu0
    %v162 = vmax.f32 %v154, 0.0
    %v163 = vmax.f32 %v158, 0.0
    %v164 = vpack.c.bf16 %v163, %v162
    %v165 = vld [vmem:[#allocation4] sm:$0xf]
    %v166 = vld [vmem:[#allocation4 + $0x4] sm:$0xf]
    %v167 = vld [vmem:[#allocation4 + $0x8] sm:$0xf]
    %v168 = vld [vmem:[#allocation4 + $0xc] sm:$0xf]
    %v169 = vld [vmem:[#allocation4 + $0x10] sm:$0xf]
    %v170 = vld [vmem:[#allocation4 + $0x14] sm:$0xf]
    %v171 = vld [vmem:[#allocation4 + $0x18] sm:$0xf]
    %v172 = vld [vmem:[#allocation4 + $0x1c] sm:$0xf]
    %v173 = vld [vmem:[#allocation4 + $0x20] sm:$0xf]
    %v174 = vld [vmem:[#allocation4 + $0x24] sm:$0xf]
    %v175 = vld [vmem:[#allocation4 + $0x28] sm:$0xf]
    %v176 = vld [vmem:[#allocation4 + $0x2c] sm:$0xf]
    %v177 = vld [vmem:[#allocation4 + $0x30] sm:$0xf]
    %v178 = vld [vmem:[#allocation4 + $0x34] sm:$0xf]
    %v179 = vld [vmem:[#allocation4 + $0x38] sm:$0xf]
    %v180 = vld [vmem:[#allocation4 + $0x3c] sm:$0xf]
    %v181 = vld [vmem:[%s4] sm:$0x1]
    %v183 = vlaneseq
    %v184 = vshrl.u32 %v183, 7
    %v185 = vsub.s32 0, %v184
    %v186 = vrot.slane %v181, %v185
    %v204 = vunpack.c.l.b16 %v165
    %v205 = vunpack.c.l.b16 %v166
    %v206 = vunpack.c.l.b16 %v167
    %v207 = vunpack.c.l.b16 %v168
    %v208 = vunpack.c.l.b16 %v169
    %v209 = vunpack.c.l.b16 %v170
    %v210 = vunpack.c.l.b16 %v171
    %v211 = vunpack.c.l.b16 %v172
    %v212 = vunpack.c.l.b16 %v173
    %v213 = vunpack.c.l.b16 %v174
    %v214 = vunpack.c.l.b16 %v175
    %v215 = vunpack.c.l.b16 %v176
    %v216 = vunpack.c.l.b16 %v177
    %v217 = vunpack.c.l.b16 %v178
    %v218 = vunpack.c.l.b16 %v179
    %v219 = vunpack.c.l.b16 %v180
    %v220 = vpack.c.b16 %v205, %v204
    %v221 = vpack.c.b16 %v207, %v206
    %v222 = vpack.c.b16 %v209, %v208
    %v223 = vpack.c.b16 %v211, %v210
    %v224 = vpack.c.b16 %v213, %v212
    %v225 = vpack.c.b16 %v215, %v214
    %v226 = vpack.c.b16 %v217, %v216
    %v227 = vpack.c.b16 %v219, %v218
    %236 = vmatprep.subr.bf16.mxu0 0
    %237 = vmatpush1.bf16.msra.mxu0 %v220
    %238 = vmatprep.subr.bf16.mxu0 0
    %239 = vmatpush1.bf16.msra.mxu0 %v221
    %240 = vmatprep.subr.bf16.mxu0 0
    %241 = vmatpush1.bf16.msra.mxu0 %v222
    %242 = vmatprep.subr.bf16.mxu0 0
    %243 = vmatpush1.bf16.msra.mxu0 %v223
    %244 = vmatprep.subr.bf16.mxu0 0
    %245 = vmatpush1.bf16.msra.mxu0 %v224
    %246 = vmatprep.subr.bf16.mxu0 0
    %247 = vmatpush1.bf16.msra.mxu0 %v225
    %248 = vmatprep.subr.bf16.mxu0 0
    %249 = vmatpush1.bf16.msra.mxu0 %v226
    %250 = vmatprep.subr.bf16.mxu0 0
    %251 = vmatpush1.bf16.msra.mxu0 %v227
    %252 = vmatprep.subr.bf16.mxu0 0
    %253 = vmatpush1.bf16.msra.mxu0 0
    %254 = vmatprep.subr.bf16.mxu0 0
    %255 = vmatpush1.bf16.msra.mxu0 0
    %256 = vmatprep.subr.bf16.mxu0 0
    %257 = vmatpush1.bf16.msra.mxu0 0
    %258 = vmatprep.subr.bf16.mxu0 0
    %259 = vmatpush1.bf16.msra.mxu0 0
    %260 = vmatprep.subr.bf16.mxu0 0
    %261 = vmatpush1.bf16.msra.mxu0 0
    %262 = vmatprep.subr.bf16.mxu0 0
    %263 = vmatpush1.bf16.msra.mxu0 0
    %264 = vmatprep.subr.bf16.mxu0 0
    %265 = vmatpush1.bf16.msra.mxu0 0
    %266 = vmatprep.subr.bf16.mxu0 0
    %267 = vmatpush1.bf16.msra.mxu0 0
    %268 = vmatprep.mubr.bf16.mxu0 0
    %269 = vmatmul.mubr.bf16.gmra.mrb[0].mxu0 %v164
    %v270 = vpop.f32.mrb[0].mxu0
    %v271 = vadd.f32 %v186, %v270
    %v272 = vpop.f32.mrb[0].mxu0
    %v273 = vpop.f32.mrb[0].mxu0
    %v274 = vadd.f32 %v186, %v273
    %v275 = vpop.f32.mrb[0].mxu0
    %276 = vdwg.mxu0
    %v277 = vadd.f32 %v271, %v156
    %v278 = vadd.f32 %v274, %v160
    %v279 = vmax.f32 %v277, 0.0
    %v280 = vmax.f32 %v278, 0.0
    %v281 = vpack.c.bf16 %v280, %v279
    %v282 = vld [vmem:[#allocation6] sm:$0xf]
    %v283 = vld [vmem:[#allocation6 + $0x4] sm:$0xf]
    %v284 = vld [vmem:[#allocation6 + $0x8] sm:$0xf]
    %v285 = vld [vmem:[#allocation6 + $0xc] sm:$0xf]
    %v286 = vld [vmem:[#allocation6 + $0x10] sm:$0xf]
    %v287 = vld [vmem:[#allocation6 + $0x14] sm:$0xf]
    %v288 = vld [vmem:[#allocation6 + $0x18] sm:$0xf]
    %v289 = vld [vmem:[#allocation6 + $0x1c] sm:$0xf]
    %v290 = vld [vmem:[#allocation6 + $0x20] sm:$0xf]
    %v291 = vld [vmem:[#allocation6 + $0x24] sm:$0xf]
    %v292 = vld [vmem:[#allocation6 + $0x28] sm:$0xf]
    %v293 = vld [vmem:[#allocation6 + $0x2c] sm:$0xf]
    %v294 = vld [vmem:[#allocation6 + $0x30] sm:$0xf]
    %v295 = vld [vmem:[#allocation6 + $0x34] sm:$0xf]
    %v296 = vld [vmem:[#allocation6 + $0x38] sm:$0xf]
    %v297 = vld [vmem:[#allocation6 + $0x3c] sm:$0xf]
    %v298 = vld [vmem:[%s6] sm:$0x1]
    %v300 = vlaneseq
    %v301 = vshrl.u32 %v300, 7
    %v302 = vsub.s32 0, %v301
    %v303 = vrot.slane %v298, %v302
    %v321 = vunpack.c.l.b16 %v282
    %v322 = vunpack.c.l.b16 %v283
    %v323 = vunpack.c.l.b16 %v284
    %v324 = vunpack.c.l.b16 %v285
    %v325 = vunpack.c.l.b16 %v286
    %v326 = vunpack.c.l.b16 %v287
    %v327 = vunpack.c.l.b16 %v288
    %v328 = vunpack.c.l.b16 %v289
    %v329 = vunpack.c.l.b16 %v290
    %v330 = vunpack.c.l.b16 %v291
    %v331 = vunpack.c.l.b16 %v292
    %v332 = vunpack.c.l.b16 %v293
    %v333 = vunpack.c.l.b16 %v294
    %v334 = vunpack.c.l.b16 %v295
    %v335 = vunpack.c.l.b16 %v296
    %v336 = vunpack.c.l.b16 %v297
    %v337 = vpack.c.b16 %v322, %v321
    %v338 = vpack.c.b16 %v324, %v323
    %v339 = vpack.c.b16 %v326, %v325
    %v340 = vpack.c.b16 %v328, %v327
    %v341 = vpack.c.b16 %v330, %v329
    %v342 = vpack.c.b16 %v332, %v331
    %v343 = vpack.c.b16 %v334, %v333
    %v344 = vpack.c.b16 %v336, %v335
    %353 = vmatprep.subr.bf16.mxu0 0
    %354 = vmatpush1.bf16.msra.mxu0 %v337
    %355 = vmatprep.subr.bf16.mxu0 0
    %356 = vmatpush1.bf16.msra.mxu0 %v338
    %357 = vmatprep.subr.bf16.mxu0 0
    %358 = vmatpush1.bf16.msra.mxu0 %v339
    %359 = vmatprep.subr.bf16.mxu0 0
    %360 = vmatpush1.bf16.msra.mxu0 %v340
    %361 = vmatprep.subr.bf16.mxu0 0
    %362 = vmatpush1.bf16.msra.mxu0 %v341
    %363 = vmatprep.subr.bf16.mxu0 0
    %364 = vmatpush1.bf16.msra.mxu0 %v342
    %365 = vmatprep.subr.bf16.mxu0 0
    %366 = vmatpush1.bf16.msra.mxu0 %v343
    %367 = vmatprep.subr.bf16.mxu0 0
    %368 = vmatpush1.bf16.msra.mxu0 %v344
    %369 = vmatprep.subr.bf16.mxu0 0
    %370 = vmatpush1.bf16.msra.mxu0 0
    %371 = vmatprep.subr.bf16.mxu0 0
    %372 = vmatpush1.bf16.msra.mxu0 0
    %373 = vmatprep.subr.bf16.mxu0 0
    %374 = vmatpush1.bf16.msra.mxu0 0
    %375 = vmatprep.subr.bf16.mxu0 0
    %376 = vmatpush1.bf16.msra.mxu0 0
    %377 = vmatprep.subr.bf16.mxu0 0
    %378 = vmatpush1.bf16.msra.mxu0 0
    %379 = vmatprep.subr.bf16.mxu0 0
    %380 = vmatpush1.bf16.msra.mxu0 0
    %381 = vmatprep.subr.bf16.mxu0 0
    %382 = vmatpush1.bf16.msra.mxu0 0
    %383 = vmatprep.subr.bf16.mxu0 0
    %384 = vmatpush1.bf16.msra.mxu0 0
    %385 = vmatprep.mubr.bf16.mxu0 0
    %386 = vmatmul.mubr.bf16.gmra.mrb[0].mxu0 %v281
    %v387 = vpop.f32.mrb[0].mxu0
    %v388 = vadd.f32 %v303, %v387
    %v389 = vpop.f32.mrb[0].mxu0
    %v390 = vpop.f32.mrb[0].mxu0
    %v391 = vadd.f32 %v303, %v390
    %v392 = vpop.f32.mrb[0].mxu0
    %393 = vdwg.mxu0
    %v394 = vmax.f32 %v388, 0.0
    %v395 = vmax.f32 %v391, 0.0
    %v396 = vpack.c.bf16 %v395, %v394
    %v397 = vld [vmem:[#allocation7] sm:$0xf]
    %v398 = vld [vmem:[#allocation7 + $0x4] sm:$0xf]
    %v399 = vld [vmem:[#allocation7 + $0x8] sm:$0xf]
    %v400 = vld [vmem:[#allocation7 + $0xc] sm:$0xf]
    %v401 = vld [vmem:[#allocation7 + $0x10] sm:$0xf]
    %v402 = vld [vmem:[#allocation7 + $0x14] sm:$0xf]
    %v403 = vld [vmem:[#allocation7 + $0x18] sm:$0xf]
    %v404 = vld [vmem:[#allocation7 + $0x1c] sm:$0xf]
    %v405 = vld [vmem:[#allocation7 + $0x20] sm:$0xf]
    %v406 = vld [vmem:[#allocation7 + $0x24] sm:$0xf]
    %v407 = vld [vmem:[#allocation7 + $0x28] sm:$0xf]
    %v408 = vld [vmem:[#allocation7 + $0x2c] sm:$0xf]
    %v409 = vld [vmem:[#allocation7 + $0x30] sm:$0xf]
    %v410 = vld [vmem:[#allocation7 + $0x34] sm:$0xf]
    %v411 = vld [vmem:[#allocation7 + $0x38] sm:$0xf]
    %v412 = vld [vmem:[#allocation7 + $0x3c] sm:$0xf]
    %v413 = vld [vmem:[%s8] sm:$0x1]
    %v415 = vlaneseq
    %v416 = vshrl.u32 %v415, 7
    %v417 = vsub.s32 0, %v416
    %v418 = vrot.slane %v413, %v417
    %v436 = vunpack.c.l.b16 %v397
    %v437 = vunpack.c.l.b16 %v398
    %v438 = vunpack.c.l.b16 %v399
    %v439 = vunpack.c.l.b16 %v400
    %v440 = vunpack.c.l.b16 %v401
    %v441 = vunpack.c.l.b16 %v402
    %v442 = vunpack.c.l.b16 %v403
    %v443 = vunpack.c.l.b16 %v404
    %v444 = vunpack.c.l.b16 %v405
    %v445 = vunpack.c.l.b16 %v406
    %v446 = vunpack.c.l.b16 %v407
    %v447 = vunpack.c.l.b16 %v408
    %v448 = vunpack.c.l.b16 %v409
    %v449 = vunpack.c.l.b16 %v410
    %v450 = vunpack.c.l.b16 %v411
    %v451 = vunpack.c.l.b16 %v412
    %v452 = vpack.c.b16 %v437, %v436
    %v453 = vpack.c.b16 %v439, %v438
    %v454 = vpack.c.b16 %v441, %v440
    %v455 = vpack.c.b16 %v443, %v442
    %v456 = vpack.c.b16 %v445, %v444
    %v457 = vpack.c.b16 %v447, %v446
    %v458 = vpack.c.b16 %v449, %v448
    %v459 = vpack.c.b16 %v451, %v450
    %468 = vmatprep.subr.bf16.mxu0 0
    %469 = vmatpush1.bf16.msra.mxu0 %v452
    %470 = vmatprep.subr.bf16.mxu0 0
    %471 = vmatpush1.bf16.msra.mxu0 %v453
    %472 = vmatprep.subr.bf16.mxu0 0
    %473 = vmatpush1.bf16.msra.mxu0 %v454
    %474 = vmatprep.subr.bf16.mxu0 0
    %475 = vmatpush1.bf16.msra.mxu0 %v455
    %476 = vmatprep.subr.bf16.mxu0 0
    %477 = vmatpush1.bf16.msra.mxu0 %v456
    %478 = vmatprep.subr.bf16.mxu0 0
    %479 = vmatpush1.bf16.msra.mxu0 %v457
    %480 = vmatprep.subr.bf16.mxu0 0
    %481 = vmatpush1.bf16.msra.mxu0 %v458
    %482 = vmatprep.subr.bf16.mxu0 0
    %483 = vmatpush1.bf16.msra.mxu0 %v459
    %484 = vmatprep.subr.bf16.mxu0 0
    %485 = vmatpush1.bf16.msra.mxu0 0
    %486 = vmatprep.subr.bf16.mxu0 0
    %487 = vmatpush1.bf16.msra.mxu0 0
    %488 = vmatprep.subr.bf16.mxu0 0
    %489 = vmatpush1.bf16.msra.mxu0 0
    %490 = vmatprep.subr.bf16.mxu0 0
    %491 = vmatpush1.bf16.msra.mxu0 0
    %492 = vmatprep.subr.bf16.mxu0 0
    %493 = vmatpush1.bf16.msra.mxu0 0
    %494 = vmatprep.subr.bf16.mxu0 0
    %495 = vmatpush1.bf16.msra.mxu0 0
    %496 = vmatprep.subr.bf16.mxu0 0
    %497 = vmatpush1.bf16.msra.mxu0 0
    %498 = vmatprep.subr.bf16.mxu0 0
    %499 = vmatpush1.bf16.msra.mxu0 0
    %500 = vmatprep.mubr.bf16.mxu0 0
    %501 = vmatmul.mubr.bf16.gmra.mrb[0].mxu0 %v396
    %v502 = vpop.f32.mrb[0].mxu0
    %v503 = vadd.f32 %v418, %v502
    %v504 = vpop.f32.mrb[0].mxu0
    %v505 = vpop.f32.mrb[0].mxu0
    %v506 = vadd.f32 %v418, %v505
    %v507 = vpop.f32.mrb[0].mxu0
    %508 = vdwg.mxu0
    %509 = vst [vmem:[%s9] sm:$0xff] %v503
    %510 = vst [vmem:[%s9 + $0x8] sm:$0xff] %v506
    // Predicated region
    $region54: #{mlp_bottle_pallas.1} parent=1 // pred_check
      _
    $region55: #{mlp_bottle_pallas.1} parent=1 // pred_check_branch
      %512 = sbr.rel (0) target = $region57
    $region56: #{mlp_bottle_pallas.1} parent=1 // pred_region
      _
    $region57: #{mlp_bottle_pallas.1} parent=1 // pred_fallthru
      _
    // Predicated region
    $region58: #{mlp_bottle_pallas.1} parent=1 // pred_check
      _
    $region59: #{mlp_bottle_pallas.1} parent=1 // pred_check_branch
      %514 = sbr.rel (0) target = $region61
    $region60: #{mlp_bottle_pallas.1} parent=1 // pred_region
      _
    $region61: #{mlp_bottle_pallas.1} parent=1 // pred_fallthru
      _
    %515 = vsyncpa [#allocation3], 1
    %516 = vsyncpa [#allocation5], 1
    %517 = vsyncpa [#allocation8], 1

</llo_original>
